<compile_context>
chip_gen: v5e
topology: v5e:2x2
jax: 0.10.0
libtpu: 0.0.40
codegen_flags: <defaults>
</compile_context>

<pallas_src>
import jax
import jax.numpy as jnp
from jax.experimental import pallas as pl
from jax.experimental.pallas import tpu as pltpu


def _classifier_kernel(inv_S):
    """Kernel closed over the static 1/S pooling scale."""

    def kernel(patches_ref, we_ref, wh_ref, out_ref, acc_ref):
        # patches_ref: (TB, TS, Dp) bf16     we_ref: (Dp, D) bf16
        # wh_ref:      (D, Cpad)    bf16
        # out_ref:     (TB, Cpad)   f32      acc_ref: (TB, D) f32 scratch
        j = pl.program_id(1)  # token-tile index (reduction axis)

        @pl.when(j == 0)
        def _init():
            acc_ref[...] = jnp.zeros_like(acc_ref)

        # Token reduction commuted through the (linear) patch-embed matmul:
        #   sum_s (p_s @ We) == (sum_s p_s) @ We
        # VPU f32 token-sum, then a single (TB, Dp) x (Dp, D) bf16 MXU matmul with f32
        # accumulation per tile (no (TB, TS, D) intermediate, FLOPs / TS).
        tok_sum = jnp.sum(patches_ref[...].astype(jnp.float32), axis=1)  # (TB, Dp) f32
        acc_ref[...] += jnp.dot(
            tok_sum.astype(jnp.bfloat16),
            we_ref[...],
            preferred_element_type=jnp.float32,
        )

        @pl.when(j == pl.num_programs(1) - 1)
        def _finalize():
            pooled = (acc_ref[...] * inv_S).astype(jnp.bfloat16)  # mean over tokens
            out_ref[...] = jnp.dot(
                pooled, wh_ref[...], preferred_element_type=jnp.float32
            )

    return kernel


def _pick_tiles(B, S, Dp, *, patch_elem_bytes=2, patches_budget=8 << 20):
    """Pick (tile_b, tile_s): big tiles within a VMEM budget, >=2 batch tiles when possible."""
    # Token tile: whole token axis up to a cap (single reduction step is best).
    if S <= 512:
        tile_s = S
    else:
        tile_s = S
        for d in range(512, 7, -1):
            if S % d == 0 and d % 8 == 0:
                tile_s = d
                break

    per_row_bytes = tile_s * Dp * patch_elem_bytes
    candidates = [d for d in range(B, 0, -1) if B % d == 0 and (d % 8 == 0 or d == B)]
    tile_b = candidates[-1] if candidates else B
    for d in candidates:
        fits = 2 * d * per_row_bytes <= patches_budget        # double-buffered patches tile
        two_tiles = (B // d >= 2) or (B < 16)                  # v7x: keep >=2 batch tiles
        if fits and two_tiles:
            tile_b = d
            break
    return tile_b, tile_s


def classifier_model_forward(images, params, *, patch_size, tile_b=None, tile_s=None):
    """images: (B, C, H, W) float32 (NCHW, PyTorch convention)."""
    B, C, H, W = images.shape
    P = patch_size
    assert H % P == 0 and W % P == 0
    S = (H // P) * (W // P)
    Dp = C * P * P

    we, be, wh, bh = params["w_embed"], params["b_embed"], params["w_head"], params["b_head"]
    D = we.shape[1]
    num_classes = wh.shape[1]

    auto_b, auto_s = _pick_tiles(B, S, Dp)
    tile_b = auto_b if tile_b is None else tile_b
    tile_s = auto_s if tile_s is None else tile_s
    assert B % tile_b == 0 and S % tile_s == 0
    assert tile_b % 8 == 0 or tile_b == B
    assert tile_s % 8 == 0 or tile_s == S

    # Glue: extract / flatten non-overlapping PxP patches (Conv2d(stride=P) patch embed),
    # keeping the (B, S, Dp) 3-D layout so the kernel tiles batch and tokens independently.
    # TODO(synk): this transpose is a full HBM round trip — see header note.
    patches = images.reshape(B, C, H // P, P, W // P, P)
    patches = patches.transpose(0, 2, 4, 1, 3, 5).reshape(B, S, Dp)
    patches_bf16 = patches.astype(jnp.bfloat16)
    we_bf16 = we.astype(jnp.bfloat16)

    # Lane-dense classifier output: pad classes up to a multiple of 128; head weight bf16.
    c_pad = max(128, ((num_classes + 127) // 128) * 128)
    wh_p = (
        jnp.zeros((D, c_pad), jnp.float32).at[:, :num_classes].set(wh).astype(jnp.bfloat16)
    )

    grid = (B // tile_b, S // tile_s)

    # Explicit scoped-VMEM limit with headroom (capped below v7x's 64 MiB physical VMEM).
    vmem_need = (
        2 * tile_b * tile_s * Dp * 2   # patches tile, bf16, double-buffered
        + 2 * Dp * D * 2               # w_embed, bf16, double-buffered
        + 2 * D * c_pad * 2            # w_head, bf16, double-buffered
        + 2 * tile_b * c_pad * 4       # output tile, f32, double-buffered
        + tile_b * D * 4               # accumulator scratch, f32
    )
    vmem_limit = int(min(56 << 20, max(32 << 20, 2 * vmem_need)))

    out = pl.pallas_call(
        _classifier_kernel(1.0 / S),
        out_shape=jax.ShapeDtypeStruct((B, c_pad), jnp.float32),
        grid_spec=pltpu.PrefetchScalarGridSpec(
            num_scalar_prefetch=0,
            grid=grid,
            in_specs=[
                pl.BlockSpec((tile_b, tile_s, Dp), lambda i, j: (i, j, 0)),
                pl.BlockSpec((Dp, D), lambda i, j: (0, 0)),
                pl.BlockSpec((D, c_pad), lambda i, j: (0, 0)),
            ],
            out_specs=pl.BlockSpec((tile_b, c_pad), lambda i, j: (i, 0)),
            scratch_shapes=[pltpu.VMEM((tile_b, D), jnp.float32)],
        ),
        compiler_params=pltpu.CompilerParams(
            dimension_semantics=("parallel", "arbitrary"),
            vmem_limit_bytes=vmem_limit,
        ),
    )(patches_bf16, we_bf16, wh_p)

    # Biases folded through the (linear) pooling + head:
    #   (mean(patches @ We) + be) @ Wh + bh == mean(patches @ We) @ Wh + (be @ Wh + bh)
    b_fused = be @ wh + bh
    return out[:, :num_classes] + b_fused


def init_params(key, *, in_ch, patch_size, hidden, num_classes):
    Dp = in_ch * patch_size * patch_size
    k1, k2, k3, k4 = jax.random.split(key, 4)
    return {
        "w_embed": jax.random.normal(k1, (Dp, hidden), jnp.float32) * 0.02,
        "b_embed": jax.random.normal(k2, (hidden,), jnp.float32) * 0.02,
        "w_head": jax.random.normal(k3, (hidden, num_classes), jnp.float32) * 0.02,
        "b_head": jax.random.normal(k4, (num_classes,), jnp.float32) * 0.02,
    }


if __name__ == "__main__":
    key = jax.random.PRNGKey(0)
    k_img, k_par = jax.random.split(key)

    B, C, H, W = 16, 3, 32, 32       # NCHW images
    PATCH = 4                        # -> S = 64 tokens
    HIDDEN = 32                      # feature dim d
    NUM_CLASSES = 10

    images = jax.random.normal(k_img, (B, C, H, W), jnp.float32)
    params = init_params(k_par, in_ch=C, patch_size=PATCH,
                         hidden=HIDDEN, num_classes=NUM_CLASSES)

    # tile_s=32 overrides the auto choice (=S) so the multi-step token-reduction /
    # accumulator path is exercised (grid = (2 batch tiles, 2 token tiles)).
    logits = classifier_model_forward(images, params, patch_size=PATCH, tile_s=32)
    logits = jax.block_until_ready(logits)
    assert logits.shape == (B, NUM_CLASSES)

    # Pure-f32 reference of the module math: mean-pool(patch_embed(images)) @ W_head + b_head.
    P = PATCH
    patches = images.reshape(B, C, H // P, P, W // P, P)
    patches = patches.transpose(0, 2, 4, 1, 3, 5).reshape(B, -1, C * P * P)
    feats_ref = patches @ params["w_embed"] + params["b_embed"]
    ref = feats_ref.mean(axis=1) @ params["w_head"] + params["b_head"]
    err = jnp.max(jnp.abs(logits - ref))
    assert jnp.allclose(logits, ref, atol=1e-3, rtol=1e-2), f"max abs err {err}"

    print("KERNEL_OK")
</pallas_src>

<mosaic_0001>
module attributes {stable_mosaic.version = 11 : i64} {
  func.func @kernel(%arg0: i32, %arg1: i32, %arg2: memref<8x32x48xbf16, #tpu.memory_space<vmem>>, %arg3: memref<48x32xbf16, #tpu.memory_space<vmem>>, %arg4: memref<32x128xbf16, #tpu.memory_space<vmem>>, %arg5: memref<8x128xf32, #tpu.memory_space<vmem>>, %arg6: memref<8x32xf32, #tpu.memory_space<vmem>>) attributes {dimension_semantics = [#tpu.dimension_semantics<parallel>, #tpu.dimension_semantics<arbitrary>], iteration_bounds = array<i64: 2, 2>, scalar_prefetch = 0 : i64, scratch_operands = 1 : i64, tpu.core_type = #tpu.core_type<tc>, window_params = [{transform_indices = @transform_0, window_bounds = array<i64: 8, 32, 48>}, {pipeline_mode = #tpu.pipeline_mode<synchronous>, transform_indices = @transform_1, window_bounds = array<i64: 48, 32>}, {pipeline_mode = #tpu.pipeline_mode<synchronous>, transform_indices = @transform_2, window_bounds = array<i64: 32, 128>}, {transform_indices = @transform_3, window_bounds = array<i64: 8, 128>}]} {
    %c0_i32 = arith.constant 0 : i32
    %0 = arith.cmpi eq, %arg1, %c0_i32 : i32
    %1 = arith.extui %0 : i1 to i32
    %c0_i32_0 = arith.constant 0 : i32
    %2 = arith.cmpi ne, %1, %c0_i32_0 : i32
    scf.if %2 {
      %cst_11 = arith.constant 0.000000e+00 : f32
      %15 = vector.broadcast %cst_11 : f32 to vector<8x32xf32>
      %c0_12 = arith.constant 0 : index
      %c0_13 = arith.constant 0 : index
      %16 = vector.load %arg6[%c0_12, %c0_13] : memref<8x32xf32, #tpu.memory_space<vmem>>, vector<8x32xf32>
      tpu.vector_store %arg6[%c0_12, %c0_13], %15 {strides = array<i32>} : memref<8x32xf32, #tpu.memory_space<vmem>>, vector<8x32xf32>,
    } else {
    }
    %c0 = arith.constant 0 : index
    %c0_1 = arith.constant 0 : index
    %c0_2 = arith.constant 0 : index
    %3 = vector.load %arg2[%c0, %c0_1, %c0_2] : memref<8x32x48xbf16, #tpu.memory_space<vmem>>, vector<8x32x48xbf16>
    %4 = arith.extf %3 : vector<8x32x48xbf16> to vector<8x32x48xf32>
    %cst = arith.constant dense<0.000000e+00> : vector<8x48xf32>
    %5 = vector.multi_reduction <add>, %4, %cst [1] : vector<8x32x48xf32> to vector<8x48xf32>
    %c0_3 = arith.constant 0 : index
    %c0_4 = arith.constant 0 : index
    %6 = vector.load %arg6[%c0_3, %c0_4] : memref<8x32xf32, #tpu.memory_space<vmem>>, vector<8x32xf32>
    %7 = arith.truncf %5 : vector<8x48xf32> to vector<8x48xbf16>
    %c0_5 = arith.constant 0 : index
    %c0_6 = arith.constant 0 : index
    %8 = vector.load %arg3[%c0_5, %c0_6] : memref<48x32xbf16, #tpu.memory_space<vmem>>, vector<48x32xbf16>
    %cst_7 = arith.constant dense<0.000000e+00> : vector<8x32xf32>
    %9 = tpu.matmul %7, %8, %cst_7 {dimension_numbers = #tpu.dot_dimension_numbers<[1], [0], [0], [1], [0, 0, 1, 1], [], []>} : vector<8x48xbf16>, vector<48x32xbf16>, vector<8x32xf32> -> vector<8x32xf32>
    %10 = arith.addf %6, %9 : vector<8x32xf32>
    %c0_8 = arith.constant 0 : index
    %c0_9 = arith.constant 0 : index
    %11 = vector.load %arg6[%c0_8, %c0_9] : memref<8x32xf32, #tpu.memory_space<vmem>>, vector<8x32xf32>
    tpu.vector_store %arg6[%c0_8, %c0_9], %10 {strides = array<i32>} : memref<8x32xf32, #tpu.memory_space<vmem>>, vector<8x32xf32>,
    %c1_i32 = arith.constant 1 : i32
    %12 = arith.cmpi eq, %arg1, %c1_i32 : i32
    %13 = arith.extui %12 : i1 to i32
    %c0_i32_10 = arith.constant 0 : i32
    %14 = arith.cmpi ne, %13, %c0_i32_10 : i32
    scf.if %14 {
      %c0_11 = arith.constant 0 : index
      %c0_12 = arith.constant 0 : index
      %15 = vector.load %arg6[%c0_11, %c0_12] : memref<8x32xf32, #tpu.memory_space<vmem>>, vector<8x32xf32>
      %cst_13 = arith.constant 1.562500e-02 : f32
      %16 = vector.broadcast %cst_13 : f32 to vector<8x32xf32>
      %17 = arith.mulf %15, %16 : vector<8x32xf32>
      %18 = arith.truncf %17 : vector<8x32xf32> to vector<8x32xbf16>
      %c0_14 = arith.constant 0 : index
      %c0_15 = arith.constant 0 : index
      %19 = vector.load %arg4[%c0_14, %c0_15] : memref<32x128xbf16, #tpu.memory_space<vmem>>, vector<32x128xbf16>
      %cst_16 = arith.constant dense<0.000000e+00> : vector<8x128xf32>
      %20 = tpu.matmul %18, %19, %cst_16 {dimension_numbers = #tpu.dot_dimension_numbers<[1], [0], [0], [1], [0, 0, 1, 1], [], []>} : vector<8x32xbf16>, vector<32x128xbf16>, vector<8x128xf32> -> vector<8x128xf32>
      %c0_17 = arith.constant 0 : index
      %c0_18 = arith.constant 0 : index
      %21 = vector.load %arg5[%c0_17, %c0_18] : memref<8x128xf32, #tpu.memory_space<vmem>>, vector<8x128xf32>
      tpu.vector_store %arg5[%c0_17, %c0_18], %20 {strides = array<i32>} : memref<8x128xf32, #tpu.memory_space<vmem>>, vector<8x128xf32>,
    } else {
    }
    return
  }
  func.func @transform_0(%arg0: i32, %arg1: i32) -> (i32, i32, i32) {
    %c0_i32 = arith.constant 0 : i32
    %c0_i32_0 = arith.constant 0 : i32
    return %arg0, %arg1, %c0_i32 : i32, i32, i32
  }
  func.func @transform_1(%arg0: i32, %arg1: i32) -> (i32, i32) {
    %c0_i32 = arith.constant 0 : i32
    %c0_i32_0 = arith.constant 0 : i32
    %c0_i32_1 = arith.constant 0 : i32
    return %c0_i32, %c0_i32_0 : i32, i32
  }
  func.func @transform_2(%arg0: i32, %arg1: i32) -> (i32, i32) {
    %c0_i32 = arith.constant 0 : i32
    %c0_i32_0 = arith.constant 0 : i32
    %c0_i32_1 = arith.constant 0 : i32
    return %c0_i32, %c0_i32_0 : i32, i32
  }
  func.func @transform_3(%arg0: i32, %arg1: i32) -> (i32, i32) {
    %c0_i32 = arith.constant 0 : i32
    %c0_i32_0 = arith.constant 0 : i32
    return %arg0, %c0_i32 : i32, i32
  }
}

</mosaic_0001>

<llo_original>
// kernel: tpu_custom_call.1
$region0: #{tpu_custom_call.1}
  #allocation0 [shape = 'u32[]', space=smem, size = 0x4, offset = 0x4, fixed_abs, tag = 'smem constant byte address 0x4 - core index']
  #allocation1 [shape = 'u32[72,128]{1,0:T(1,128)}', space=vmem, size = 0x9000, scoped, tag = 'internal scratch']
  #allocation2 [shape = 'f32[8,32]{1,0:T(8,128)}', space=vmem, size = 0x1000, scoped, tag = 'scratch operand']
  %s0 = inlined_call_operand.vmem [shape: bf16[16,64,48], index: 0, kind: input, shape index: {}]
  %s1 = inlined_call_operand.vmem [shape: bf16[48,32], index: 1, kind: input, shape index: {}]
  %s2 = inlined_call_operand.vmem [shape: bf16[32,128], index: 2, kind: input, shape index: {}]
  %s3 = inlined_call_operand.hbm [shape: f32[16,128], index: 3, kind: output, shape index: {}]
  %s4 = sld [smem:[#allocation0]]
  $region94: #{tpu_custom_call.1} parent=0
    _
  %s6 = ssub.s32 1, %s4
  %s7 = scalar_select 0, %s6, %s4
  $region1: #{tpu_custom_call.1} parent=0
    #allocation3 [shape = 'u8[131072]{0}', space=vmem, size = 0x20000, scoped, tag = 'input window, operand 0']
    #allocation4 [shape = 'u8[8192]{0}', space=vmem, size = 0x2000, scoped, tag = 'output window, operand 0']
    #allocation5 [shape = 's32[2]{0}', space=sflag, size = 0x8, scoped, tag = 'scoped memory for tpu_custom_call.1']
    %8 = vsyncpa [#allocation5], 0
    %s9 = scalar_lea.sflag [#allocation5], 1
    %10 = vsyncpa %s9, 0
    loop: start=0, step=1, limit=6
    $region2: #{tpu_custom_call.1} parent=1 // loop_pre_header
      _
    $region3: #{tpu_custom_call.1} parent=1 // loop_header
      %s12 = sphi 0, %s16
      %p13 = scmp.ge.s32.totalorder %s12, 6
      %s19 = sphi 0, %s31
      %s20 = sphi 0, %s27
      %s21 = sphi 0, %s19
      %s22 = sphi 0, %s20
      %s23 = sphi 0, %s21
      %s24 = sphi 0, %s22
      %s36 = sphi 0, %s38
      %s39 = sphi 0, %s36
      %s40 = sphi 0, %s39
      %s56 = sphi 0, %s40
      %s60 = sphi 0, %s60
      %s62 = sphi 0, %s60
      %s63 = sphi 0, %s62
      %s77 = sphi 0, %s63
      %s81 = sphi 0, %s81
      %s83 = sphi 0, %s81
      %s84 = sphi 0, %s83
      %s98 = sphi 0, %s84
      %s104 = sphi 0, %s106
      %s107 = sphi 0, %s104
      %s108 = sphi 0, %s107
      %s124 = sphi 0, %s108
    $region4: #{tpu_custom_call.1} parent=1 // loop_header_branch
      %15 = sbr.rel (%p13) target = $region8
    $region5: #{tpu_custom_call.1} parent=1 // loop_body
      %s17 = ssub.s32 %s12, 1
      %s18 = ssub.s32 %s12, 2
      %s25 = sadd.s32 1, %s20
      %p26 = scmp.ge.s32.totalorder %s25, 2
      %s27 = scalar_select %p26, 0, %s25
      %s28 = sadd.s32 1, %s19
      %s29 = scalar_select %p26, %s28, %s19
      %p30 = scmp.ge.s32.totalorder %s29, 2
      %s31 = scalar_select %p30, 0, %s29
      %s32 = ssub.s32 %s19, %s31
      %s33 = ssub.s32 %s20, %s27
      %s34 = sor.u32 %s32, %s33
      %p35 = scmp.eq.s32.totalorder %s34, 0
      %s37 = sadd.s32 %s36, 1
      %s38 = scalar_select %p35, %s36, %s37
      %p41 = pneg %p35
      %p42 = scmp.eq.s32.totalorder %s12, 3
      %p43 = por %p41, %p42
      %p44 = scmp.ne.s32.totalorder %s36, %s39
      %p45 = scmp.eq.s32.totalorder %s12, 0
      %p46 = por %p44, %p45
      %p47 = scmp.ne.s32.totalorder %s36, %s39
      %p48 = scmp.eq.s32.totalorder %s17, 3
      %p49 = por %p47, %p48
      %p50 = scmp.ne.s32.totalorder %s39, %s40
      %p51 = scmp.eq.s32.totalorder %s17, 0
      %p52 = por %p50, %p51
      %p53 = scmp.ne.s32.totalorder %s39, %s40
      %p54 = scmp.eq.s32.totalorder %s18, 3
      %p55 = por %p53, %p54
      %p57 = scmp.ne.s32.totalorder %s40, %s56
      %p58 = scmp.eq.s32.totalorder %s18, 0
      %p59 = por %p57, %p58
      %s61 = sadd.s32 %s60, 1
      %p64 = scmp.eq.s32.totalorder %s12, 3
      %p65 = scmp.ne.s32.totalorder %s60, %s62
      %p66 = scmp.eq.s32.totalorder %s12, 0
      %p67 = por %p65, %p66
      %p68 = scmp.ne.s32.totalorder %s60, %s62
      %p69 = scmp.eq.s32.totalorder %s17, 3
      %p70 = por %p68, %p69
      %p71 = scmp.ne.s32.totalorder %s62, %s63
      %p72 = scmp.eq.s32.totalorder %s17, 0
      %p73 = por %p71, %p72
      %p74 = scmp.ne.s32.totalorder %s62, %s63
      %p75 = scmp.eq.s32.totalorder %s18, 3
      %p76 = por %p74, %p75
      %p78 = scmp.ne.s32.totalorder %s63, %s77
      %p79 = scmp.eq.s32.totalorder %s18, 0
      %p80 = por %p78, %p79
      %s82 = sadd.s32 %s81, 1
      %p85 = scmp.eq.s32.totalorder %s12, 3
      %p86 = scmp.ne.s32.totalorder %s81, %s83
      %p87 = scmp.eq.s32.totalorder %s12, 0
      %p88 = por %p86, %p87
      %p89 = scmp.ne.s32.totalorder %s81, %s83
      %p90 = scmp.eq.s32.totalorder %s17, 3
      %p91 = por %p89, %p90
      %p92 = scmp.ne.s32.totalorder %s83, %s84
      %p93 = scmp.eq.s32.totalorder %s17, 0
      %p94 = por %p92, %p93
      %p95 = scmp.ne.s32.totalorder %s83, %s84
      %p96 = scmp.eq.s32.totalorder %s18, 3
      %p97 = por %p95, %p96
      %p99 = scmp.ne.s32.totalorder %s84, %s98
      %p100 = scmp.eq.s32.totalorder %s18, 0
      %p101 = por %p99, %p100
      %s102 = ssub.s32 %s19, %s31
      %p103 = scmp.eq.s32.totalorder %s102, 0
      %s105 = sadd.s32 %s104, 1
      %s106 = scalar_select %p103, %s104, %s105
      %p109 = pneg %p103
      %p110 = scmp.eq.s32.totalorder %s12, 3
      %p111 = por %p109, %p110
      %p112 = scmp.ne.s32.totalorder %s104, %s107
      %p113 = scmp.eq.s32.totalorder %s12, 0
      %p114 = por %p112, %p113
      %p115 = scmp.ne.s32.totalorder %s104, %s107
      %p116 = scmp.eq.s32.totalorder %s17, 3
      %p117 = por %p115, %p116
      %p118 = scmp.ne.s32.totalorder %s107, %s108
      %p119 = scmp.eq.s32.totalorder %s17, 0
      %p120 = por %p118, %p119
      %p121 = scmp.ne.s32.totalorder %s107, %s108
      %p122 = scmp.eq.s32.totalorder %s18, 3
      %p123 = por %p121, %p122
      %p125 = scmp.ne.s32.totalorder %s108, %s124
      %p126 = scmp.eq.s32.totalorder %s18, 0
      %p127 = por %p125, %p126
      %p128 = scmp.le.s32.totalorder 1, %s12
      %p129 = scmp.lt.s32.totalorder %s12, 5
      %p130 = pnand %p128, %p129
      %p131 = pneg %p130
      // Predicated region
      $region9: #{tpu_custom_call.1} parent=5 // pred_check
        _
      $region10: #{tpu_custom_call.1} parent=5 // pred_check_branch
        %133 = sbr.rel (%p130) target = $region12
      $region11: #{tpu_custom_call.1} parent=5 // pred_region
        %s134 = ssub.s32 %s12, 1
        // Predicated region
        $region13: #{tpu_custom_call.1} parent=11 // pred_check
          %p135 = pneg %p73
        $region14: #{tpu_custom_call.1} parent=11 // pred_check_branch
          %137 = sbr.rel (%p135) target = $region16
        $region15: #{tpu_custom_call.1} parent=11 // pred_region
          _
        $region16: #{tpu_custom_call.1} parent=11 // pred_fallthru
          _
        // Predicated region
        $region17: #{tpu_custom_call.1} parent=11 // pred_check
          %p138 = pneg %p94
        $region18: #{tpu_custom_call.1} parent=11 // pred_check_branch
          %140 = sbr.rel (%p138) target = $region20
        $region19: #{tpu_custom_call.1} parent=11 // pred_region
          _
        $region20: #{tpu_custom_call.1} parent=11 // pred_fallthru
          _
      $region12: #{tpu_custom_call.1} parent=5 // pred_fallthru
        _
      %p141 = scmp.lt.s32.totalorder %s12, 4
      // Predicated region
      $region21: #{tpu_custom_call.1} parent=5 // pred_check
        %p142 = pneg %p141
      $region22: #{tpu_custom_call.1} parent=5 // pred_check_branch
        %144 = sbr.rel (%p142) target = $region24
      $region23: #{tpu_custom_call.1} parent=5 // pred_region
        // Predicated region
        $region25: #{tpu_custom_call.1} parent=23 // pred_check
          %p145 = pneg %p46
        $region26: #{tpu_custom_call.1} parent=23 // pred_check_branch
          %147 = sbr.rel (%p145) target = $region28
        $region27: #{tpu_custom_call.1} parent=23 // pred_region
          %s148 = sand.u32 %s36, 1
          %s149 = sand.u32 %s36, 1
          %s150 = smul.addr %s149, 128
          %s151 = scalar_lea.vmem [#allocation3], %s150
          %s152 = smul.u32 8, %s19
          %s153 = smul.u32 4, %s20
          %s154 = smul.addr %s152, 8
          %s155 = sadd.s32 %s153, %s154
          %s156 = smul.addr %s155, 4
          %s157 = scalar_lea.vmem %s0, %s156
          // Predicated region
          $region29: #{tpu_custom_call.1} parent=27 // pred_check
            _
          $region30: #{tpu_custom_call.1} parent=27 // pred_check_branch
            %159 = sbr.rel (0) target = $region32
          $region31: #{tpu_custom_call.1} parent=27 // pred_region
            // Predicated region
            $region33: #{tpu_custom_call.1} parent=31 // pred_check
              _
            $region34: #{tpu_custom_call.1} parent=31 // pred_check_branch
              %161 = sbr.rel target = $region36
            $region35: #{tpu_custom_call.1} parent=31 // pred_region
              // Predicated region
              $region48: #{tpu_custom_call.1} parent=35 // pred_check
                _
              $region49: #{tpu_custom_call.1} parent=35 // pred_check_branch
                %239 = sbr.rel (0) target = $region51
              $region50: #{tpu_custom_call.1} parent=35 // pred_region
                loop: start=0, step=1, limit=1
                $region52: #{tpu_custom_call.1} parent=50 // loop_pre_header
                  _
                $region53: #{tpu_custom_call.1} parent=50 // loop_header
                  %s241 = sphi 0, %s245
                  %p242 = scmp.ge.s32.totalorder %s241, 1
                  %s246 = sphi %s157, %s157
                  %s247 = sphi %s151, %s151
                $region54: #{tpu_custom_call.1} parent=50 // loop_header_branch
                  %244 = sbr.rel (%p242) target = $region58
                $region55: #{tpu_custom_call.1} parent=50 // loop_body
                  _
                $region56: #{tpu_custom_call.1} parent=50 // loop_footer
                  %s245 = sadd.s32 1, %s241
                $region57: #{tpu_custom_call.1} parent=50 // loop_footer_branch
                  %240 = sbr.rel target = $region53
                $region58: #{tpu_custom_call.1} parent=50 // loop_exit
                  _
                %s249 = ssub.s32 16, 1
                loop: start=0, step=1, limit=1
                $region59: #{tpu_custom_call.1} parent=50 // loop_pre_header
                  _
                $region60: #{tpu_custom_call.1} parent=50 // loop_header
                  %s251 = sphi 0, %s255
                  %p252 = scmp.ge.s32.totalorder %s251, 1
                  %s256 = sphi %s157, %s157
                  %s257 = sphi %s151, %s151
                $region61: #{tpu_custom_call.1} parent=50 // loop_header_branch
                  %254 = sbr.rel (%p252) target = $region65
                $region62: #{tpu_custom_call.1} parent=50 // loop_body
                  %v258 = vld [vmem:[%s256] sm:%s249]
                  %259 = vst [vmem:[%s257] sm:%s249] %v258
                  %v260 = vld [vmem:[%s256 + $0x4] sm:%s249]
                  %261 = vst [vmem:[%s257 + $0x4] sm:%s249] %v260
                  %v262 = vld [vmem:[%s256 + $0x8] sm:%s249]
                  %263 = vst [vmem:[%s257 + $0x8] sm:%s249] %v262
                  %v264 = vld [vmem:[%s256 + $0xc] sm:%s249]
                  %265 = vst [vmem:[%s257 + $0xc] sm:%s249] %v264
                  %v266 = vld [vmem:[%s256 + $0x20] sm:%s249]
                  %267 = vst [vmem:[%s257 + $0x10] sm:%s249] %v266
                  %v268 = vld [vmem:[%s256 + $0x24] sm:%s249]
                  %269 = vst [vmem:[%s257 + $0x14] sm:%s249] %v268
                  %v270 = vld [vmem:[%s256 + $0x28] sm:%s249]
                  %271 = vst [vmem:[%s257 + $0x18] sm:%s249] %v270
                  %v272 = vld [vmem:[%s256 + $0x2c] sm:%s249]
                  %273 = vst [vmem:[%s257 + $0x1c] sm:%s249] %v272
                  %v274 = vld [vmem:[%s256 + $0x40] sm:%s249]
                  %275 = vst [vmem:[%s257 + $0x20] sm:%s249] %v274
                  %v276 = vld [vmem:[%s256 + $0x44] sm:%s249]
                  %277 = vst [vmem:[%s257 + $0x24] sm:%s249] %v276
                  %v278 = vld [vmem:[%s256 + $0x48] sm:%s249]
                  %279 = vst [vmem:[%s257 + $0x28] sm:%s249] %v278
                  %v280 = vld [vmem:[%s256 + $0x4c] sm:%s249]
                  %281 = vst [vmem:[%s257 + $0x2c] sm:%s249] %v280
                  %v282 = vld [vmem:[%s256 + $0x60] sm:%s249]
                  %283 = vst [vmem:[%s257 + $0x30] sm:%s249] %v282
                  %v284 = vld [vmem:[%s256 + $0x64] sm:%s249]
                  %285 = vst [vmem:[%s257 + $0x34] sm:%s249] %v284
                  %v286 = vld [vmem:[%s256 + $0x68] sm:%s249]
                  %287 = vst [vmem:[%s257 + $0x38] sm:%s249] %v286
                  %v288 = vld [vmem:[%s256 + $0x6c] sm:%s249]
                  %289 = vst [vmem:[%s257 + $0x3c] sm:%s249] %v288
                  %v290 = vld [vmem:[%s256 + $0x80] sm:%s249]
                  %291 = vst [vmem:[%s257 + $0x40] sm:%s249] %v290
                  %v292 = vld [vmem:[%s256 + $0x84] sm:%s249]
                  %293 = vst [vmem:[%s257 + $0x44] sm:%s249] %v292
                  %v294 = vld [vmem:[%s256 + $0x88] sm:%s249]
                  %295 = vst [vmem:[%s257 + $0x48] sm:%s249] %v294
                  %v296 = vld [vmem:[%s256 + $0x8c] sm:%s249]
                  %297 = vst [vmem:[%s257 + $0x4c] sm:%s249] %v296
                  %v298 = vld [vmem:[%s256 + $0xa0] sm:%s249]
                  %299 = vst [vmem:[%s257 + $0x50] sm:%s249] %v298
                  %v300 = vld [vmem:[%s256 + $0xa4] sm:%s249]
                  %301 = vst [vmem:[%s257 + $0x54] sm:%s249] %v300
                  %v302 = vld [vmem:[%s256 + $0xa8] sm:%s249]
                  %303 = vst [vmem:[%s257 + $0x58] sm:%s249] %v302
                  %v304 = vld [vmem:[%s256 + $0xac] sm:%s249]
                  %305 = vst [vmem:[%s257 + $0x5c] sm:%s249] %v304
                  %v306 = vld [vmem:[%s256 + $0xc0] sm:%s249]
                  %307 = vst [vmem:[%s257 + $0x60] sm:%s249] %v306
                  %v308 = vld [vmem:[%s256 + $0xc4] sm:%s249]
                  %309 = vst [vmem:[%s257 + $0x64] sm:%s249] %v308
                  %v310 = vld [vmem:[%s256 + $0xc8] sm:%s249]
                  %311 = vst [vmem:[%s257 + $0x68] sm:%s249] %v310
                  %v312 = vld [vmem:[%s256 + $0xcc] sm:%s249]
                  %313 = vst [vmem:[%s257 + $0x6c] sm:%s249] %v312
                  %v314 = vld [vmem:[%s256 + $0xe0] sm:%s249]
                  %315 = vst [vmem:[%s257 + $0x70] sm:%s249] %v314
                  %v316 = vld [vmem:[%s256 + $0xe4] sm:%s249]
                  %317 = vst [vmem:[%s257 + $0x74] sm:%s249] %v316
                  %v318 = vld [vmem:[%s256 + $0xe8] sm:%s249]
                  %319 = vst [vmem:[%s257 + $0x78] sm:%s249] %v318
                  %v320 = vld [vmem:[%s256 + $0xec] sm:%s249]
                  %321 = vst [vmem:[%s257 + $0x7c] sm:%s249] %v320
                $region63: #{tpu_custom_call.1} parent=50 // loop_footer
                  %s255 = sadd.s32 1, %s251
                $region64: #{tpu_custom_call.1} parent=50 // loop_footer_branch
                  %250 = sbr.rel target = $region60
                $region65: #{tpu_custom_call.1} parent=50 // loop_exit
                  _
              $region51: #{tpu_custom_call.1} parent=35 // pred_fallthru
                _
            $region36: #{tpu_custom_call.1} parent=31 // pred_fallthru
              _
            // Predicated region
            $region37: #{tpu_custom_call.1} parent=31 // pred_check
              _
            $region38: #{tpu_custom_call.1} parent=31 // pred_check_branch
              %163 = sbr.rel (0) target = $region40
            $region39: #{tpu_custom_call.1} parent=31 // pred_region
              %s165 = ssub.s32 16, 1
              loop: start=0, step=1, limit=1
              $region41: #{tpu_custom_call.1} parent=39 // loop_pre_header
                _
              $region42: #{tpu_custom_call.1} parent=39 // loop_header
                %s167 = sphi 0, %s171
                %p168 = scmp.ge.s32.totalorder %s167, 1
                %s172 = sphi %s157, %s157
                %s173 = sphi %s151, %s151
              $region43: #{tpu_custom_call.1} parent=39 // loop_header_branch
                %170 = sbr.rel (%p168) target = $region47
              $region44: #{tpu_custom_call.1} parent=39 // loop_body
                %v174 = vld [vmem:[%s172] sm:%s165]
                %175 = vst [vmem:[%s173] sm:%s165] %v174
                %v176 = vld [vmem:[%s172 + $0x4] sm:%s165]
                %177 = vst [vmem:[%s173 + $0x4] sm:%s165] %v176
                %v178 = vld [vmem:[%s172 + $0x8] sm:%s165]
                %179 = vst [vmem:[%s173 + $0x8] sm:%s165] %v178
                %v180 = vld [vmem:[%s172 + $0xc] sm:%s165]
                %181 = vst [vmem:[%s173 + $0xc] sm:%s165] %v180
                %v182 = vld [vmem:[%s172 + $0x20] sm:%s165]
                %183 = vst [vmem:[%s173 + $0x10] sm:%s165] %v182
                %v184 = vld [vmem:[%s172 + $0x24] sm:%s165]
                %185 = vst [vmem:[%s173 + $0x14] sm:%s165] %v184
                %v186 = vld [vmem:[%s172 + $0x28] sm:%s165]
                %187 = vst [vmem:[%s173 + $0x18] sm:%s165] %v186
                %v188 = vld [vmem:[%s172 + $0x2c] sm:%s165]
                %189 = vst [vmem:[%s173 + $0x1c] sm:%s165] %v188
                %v190 = vld [vmem:[%s172 + $0x40] sm:%s165]
                %191 = vst [vmem:[%s173 + $0x20] sm:%s165] %v190
                %v192 = vld [vmem:[%s172 + $0x44] sm:%s165]
                %193 = vst [vmem:[%s173 + $0x24] sm:%s165] %v192
                %v194 = vld [vmem:[%s172 + $0x48] sm:%s165]
                %195 = vst [vmem:[%s173 + $0x28] sm:%s165] %v194
                %v196 = vld [vmem:[%s172 + $0x4c] sm:%s165]
                %197 = vst [vmem:[%s173 + $0x2c] sm:%s165] %v196
                %v198 = vld [vmem:[%s172 + $0x60] sm:%s165]
                %199 = vst [vmem:[%s173 + $0x30] sm:%s165] %v198
                %v200 = vld [vmem:[%s172 + $0x64] sm:%s165]
                %201 = vst [vmem:[%s173 + $0x34] sm:%s165] %v200
                %v202 = vld [vmem:[%s172 + $0x68] sm:%s165]
                %203 = vst [vmem:[%s173 + $0x38] sm:%s165] %v202
                %v204 = vld [vmem:[%s172 + $0x6c] sm:%s165]
                %205 = vst [vmem:[%s173 + $0x3c] sm:%s165] %v204
                %v206 = vld [vmem:[%s172 + $0x80] sm:%s165]
                %207 = vst [vmem:[%s173 + $0x40] sm:%s165] %v206
                %v208 = vld [vmem:[%s172 + $0x84] sm:%s165]
                %209 = vst [vmem:[%s173 + $0x44] sm:%s165] %v208
                %v210 = vld [vmem:[%s172 + $0x88] sm:%s165]
                %211 = vst [vmem:[%s173 + $0x48] sm:%s165] %v210
                %v212 = vld [vmem:[%s172 + $0x8c] sm:%s165]
                %213 = vst [vmem:[%s173 + $0x4c] sm:%s165] %v212
                %v214 = vld [vmem:[%s172 + $0xa0] sm:%s165]
                %215 = vst [vmem:[%s173 + $0x50] sm:%s165] %v214
                %v216 = vld [vmem:[%s172 + $0xa4] sm:%s165]
                %217 = vst [vmem:[%s173 + $0x54] sm:%s165] %v216
                %v218 = vld [vmem:[%s172 + $0xa8] sm:%s165]
                %219 = vst [vmem:[%s173 + $0x58] sm:%s165] %v218
                %v220 = vld [vmem:[%s172 + $0xac] sm:%s165]
                %221 = vst [vmem:[%s173 + $0x5c] sm:%s165] %v220
                %v222 = vld [vmem:[%s172 + $0xc0] sm:%s165]
                %223 = vst [vmem:[%s173 + $0x60] sm:%s165] %v222
                %v224 = vld [vmem:[%s172 + $0xc4] sm:%s165]
                %225 = vst [vmem:[%s173 + $0x64] sm:%s165] %v224
                %v226 = vld [vmem:[%s172 + $0xc8] sm:%s165]
                %227 = vst [vmem:[%s173 + $0x68] sm:%s165] %v226
                %v228 = vld [vmem:[%s172 + $0xcc] sm:%s165]
                %229 = vst [vmem:[%s173 + $0x6c] sm:%s165] %v228
                %v230 = vld [vmem:[%s172 + $0xe0] sm:%s165]
                %231 = vst [vmem:[%s173 + $0x70] sm:%s165] %v230
                %v232 = vld [vmem:[%s172 + $0xe4] sm:%s165]
                %233 = vst [vmem:[%s173 + $0x74] sm:%s165] %v232
                %v234 = vld [vmem:[%s172 + $0xe8] sm:%s165]
                %235 = vst [vmem:[%s173 + $0x78] sm:%s165] %v234
                %v236 = vld [vmem:[%s172 + $0xec] sm:%s165]
                %237 = vst [vmem:[%s173 + $0x7c] sm:%s165] %v236
              $region45: #{tpu_custom_call.1} parent=39 // loop_footer
                %s171 = sadd.s32 1, %s167
              $region46: #{tpu_custom_call.1} parent=39 // loop_footer_branch
                %166 = sbr.rel target = $region42
              $region47: #{tpu_custom_call.1} parent=39 // loop_exit
                _
            $region40: #{tpu_custom_call.1} parent=31 // pred_fallthru
              _
          $region32: #{tpu_custom_call.1} parent=27 // pred_fallthru
            _
          %322 = vnop
        $region28: #{tpu_custom_call.1} parent=23 // pred_fallthru
          _
      $region24: #{tpu_custom_call.1} parent=5 // pred_fallthru
        _
      %p323 = scmp.le.s32.totalorder 1, %s12
      %p324 = scmp.lt.s32.totalorder %s12, 5
      %p325 = pnand %p323, %p324
      %p326 = pneg %p325
      // Predicated region
      $region66: #{tpu_custom_call.1} parent=5 // pred_check
        _
      $region67: #{tpu_custom_call.1} parent=5 // pred_check_branch
        %328 = sbr.rel (%p325) target = $region69
      $region68: #{tpu_custom_call.1} parent=5 // pred_region
        %s329 = ssub.s32 %s12, 1
        %s330 = sand.u32 %s39, 1
        %s331 = sand.u32 %s39, 1
        %s332 = smul.addr %s331, 128
        %s333 = scalar_lea.vmem [#allocation3], %s332
        // Predicated region
        $region70: #{tpu_custom_call.1} parent=68 // pred_check
          %p334 = pneg %p52
        $region71: #{tpu_custom_call.1} parent=68 // pred_check_branch
          %336 = sbr.rel (%p334) target = $region73
        $region72: #{tpu_custom_call.1} parent=68 // pred_region
          _
        $region73: #{tpu_custom_call.1} parent=68 // pred_fallthru
          _
        %s337 = sand.u32 %s39, 1
        %s338 = sand.u32 %s39, 1
        %s339 = smul.addr %s338, 128
        %s340 = scalar_lea.vmem [#allocation3], %s339
        %p341 = pneg %p52
        %p342 = pneg %p49
        %p343 = pneg %p73
        %p344 = pneg %p70
        %p345 = pneg %p94
        %p346 = pneg %p91
        %p347 = pneg %p120
        %p348 = pneg %p117
        %s349 = sand.u32 %s107, 1
        %s350 = scalar_lea.sflag [#allocation5], %s349
        %s351 = sand.u32 %s107, 1
        %s352 = smul.addr %s351, 8
        %s353 = scalar_lea.vmem [#allocation4], %s352
        %s354 = smul.u32 8, %s21
        %s355 = smul.u32 4, %s22
        %p357 = scmp.eq.s32.totalorder %s22, 0
        // Predicated region
        $region74: #{tpu_custom_call.1} parent=68 // pred_check
          %p358 = pneg %p357
        $region75: #{tpu_custom_call.1} parent=68 // pred_check_branch
          %360 = sbr.rel (%p358) target = $region77
        $region76: #{tpu_custom_call.1} parent=68 // pred_region
          %vm361 = vcmask 261120
          %362 = vst.msk [vmem:[#allocation2] sm:$0xff] %vm361, 0.0
        $region77: #{tpu_custom_call.1} parent=68 // pred_fallthru
          _
        %v363 = vld [vmem:[%s333] sm:$0xf]
        %v364 = vld [vmem:[%s333 + $0x4] sm:$0xf]
        %v365 = vld [vmem:[%s333 + $0x8] sm:$0xf]
        %v366 = vld [vmem:[%s333 + $0xc] sm:$0xf]
        %v367 = vld [vmem:[%s333 + $0x10] sm:$0xf]
        %v368 = vld [vmem:[%s333 + $0x14] sm:$0xf]
        %v369 = vld [vmem:[%s333 + $0x18] sm:$0xf]
        %v370 = vld [vmem:[%s333 + $0x1c] sm:$0xf]
        %v371 = vld [vmem:[%s333 + $0x20] sm:$0xf]
        %v372 = vld [vmem:[%s333 + $0x24] sm:$0xf]
        %v373 = vld [vmem:[%s333 + $0x28] sm:$0xf]
        %v374 = vld [vmem:[%s333 + $0x2c] sm:$0xf]
        %v375 = vld [vmem:[%s333 + $0x30] sm:$0xf]
        %v376 = vld [vmem:[%s333 + $0x34] sm:$0xf]
        %v377 = vld [vmem:[%s333 + $0x38] sm:$0xf]
        %v378 = vld [vmem:[%s333 + $0x3c] sm:$0xf]
        %v379 = vld [vmem:[%s333 + $0x40] sm:$0xf]
        %v380 = vld [vmem:[%s333 + $0x44] sm:$0xf]
        %v381 = vld [vmem:[%s333 + $0x48] sm:$0xf]
        %v382 = vld [vmem:[%s333 + $0x4c] sm:$0xf]
        %v383 = vld [vmem:[%s333 + $0x50] sm:$0xf]
        %v384 = vld [vmem:[%s333 + $0x54] sm:$0xf]
        %v385 = vld [vmem:[%s333 + $0x58] sm:$0xf]
        %v386 = vld [vmem:[%s333 + $0x5c] sm:$0xf]
        %v387 = vld [vmem:[%s333 + $0x60] sm:$0xf]
        %v388 = vld [vmem:[%s333 + $0x64] sm:$0xf]
        %v389 = vld [vmem:[%s333 + $0x68] sm:$0xf]
        %v390 = vld [vmem:[%s333 + $0x6c] sm:$0xf]
        %v391 = vld [vmem:[%s333 + $0x70] sm:$0xf]
        %v392 = vld [vmem:[%s333 + $0x74] sm:$0xf]
        %v393 = vld [vmem:[%s333 + $0x78] sm:$0xf]
        %v394 = vld [vmem:[%s333 + $0x7c] sm:$0xf]
        %v395 = vunpack.c.l.bf16 %v363
        %v396 = vunpack.c.l.bf16 %v364
        %v397 = vunpack.c.l.bf16 %v365
        %v398 = vunpack.c.l.bf16 %v366
        %v399 = vunpack.c.l.bf16 %v367
        %v400 = vunpack.c.l.bf16 %v368
        %v401 = vunpack.c.l.bf16 %v369
        %v402 = vunpack.c.l.bf16 %v370
        %v403 = vunpack.c.l.bf16 %v371
        %v404 = vunpack.c.l.bf16 %v372
        %v405 = vunpack.c.l.bf16 %v373
        %v406 = vunpack.c.l.bf16 %v374
        %v407 = vunpack.c.l.bf16 %v375
        %v408 = vunpack.c.l.bf16 %v376
        %v409 = vunpack.c.l.bf16 %v377
        %v410 = vunpack.c.l.bf16 %v378
        %v411 = vunpack.c.l.bf16 %v379
        %v412 = vunpack.c.l.bf16 %v380
        %v413 = vunpack.c.l.bf16 %v381
        %v414 = vunpack.c.l.bf16 %v382
        %v415 = vunpack.c.l.bf16 %v383
        %v416 = vunpack.c.l.bf16 %v384
        %v417 = vunpack.c.l.bf16 %v385
        %v418 = vunpack.c.l.bf16 %v386
        %v419 = vunpack.c.l.bf16 %v387
        %v420 = vunpack.c.l.bf16 %v388
        %v421 = vunpack.c.l.bf16 %v389
        %v422 = vunpack.c.l.bf16 %v390
        %v423 = vunpack.c.l.bf16 %v391
        %v424 = vunpack.c.l.bf16 %v392
        %v425 = vunpack.c.l.bf16 %v393
        %v426 = vunpack.c.l.bf16 %v394
        %vm427 = vcmask 392192
        %v428 = vsel %vm427, %v395, 0.0
        %v429 = vsel %vm427, %v396, 0.0
        %v430 = vadd.f32 %v428, %v429
        %v431 = vsel %vm427, %v397, 0.0
        %v432 = vadd.f32 %v430, %v431
        %v433 = vsel %vm427, %v398, 0.0
        %v434 = vadd.f32 %v432, %v433
        %v435 = vrot.slane %v434, 4
        %v436 = vadd.f32 %v434, %v435
        %v437 = vrot.slane %v436, 2
        %v438 = vadd.f32 %v436, %v437
        %v439 = vrot.slane %v438, 1
        %v440 = vadd.f32 %v438, %v439
        %v441 = vsel %vm427, %v399, 0.0
        %v442 = vsel %vm427, %v400, 0.0
        %v443 = vadd.f32 %v441, %v442
        %v444 = vsel %vm427, %v401, 0.0
        %v445 = vadd.f32 %v443, %v444
        %v446 = vsel %vm427, %v402, 0.0
        %v447 = vadd.f32 %v445, %v446
        %v448 = vrot.slane %v447, 4
        %v449 = vadd.f32 %v447, %v448
        %v450 = vrot.slane %v449, 2
        %v451 = vadd.f32 %v449, %v450
        %v452 = vrot.slane %v451, 1
        %v453 = vadd.f32 %v451, %v452
        %v454 = vsel %vm427, %v403, 0.0
        %v455 = vsel %vm427, %v404, 0.0
        %v456 = vadd.f32 %v454, %v455
        %v457 = vsel %vm427, %v405, 0.0
        %v458 = vadd.f32 %v456, %v457
        %v459 = vsel %vm427, %v406, 0.0
        %v460 = vadd.f32 %v458, %v459
        %v461 = vrot.slane %v460, 4
        %v462 = vadd.f32 %v460, %v461
        %v463 = vrot.slane %v462, 2
        %v464 = vadd.f32 %v462, %v463
        %v465 = vrot.slane %v464, 1
        %v466 = vadd.f32 %v464, %v465
        %v467 = vsel %vm427, %v407, 0.0
        %v468 = vsel %vm427, %v408, 0.0
        %v469 = vadd.f32 %v467, %v468
        %v470 = vsel %vm427, %v409, 0.0
        %v471 = vadd.f32 %v469, %v470
        %v472 = vsel %vm427, %v410, 0.0
        %v473 = vadd.f32 %v471, %v472
        %v474 = vrot.slane %v473, 4
        %v475 = vadd.f32 %v473, %v474
        %v476 = vrot.slane %v475, 2
        %v477 = vadd.f32 %v475, %v476
        %v478 = vrot.slane %v477, 1
        %v479 = vadd.f32 %v477, %v478
        %v480 = vsel %vm427, %v411, 0.0
        %v481 = vsel %vm427, %v412, 0.0
        %v482 = vadd.f32 %v480, %v481
        %v483 = vsel %vm427, %v413, 0.0
        %v484 = vadd.f32 %v482, %v483
        %v485 = vsel %vm427, %v414, 0.0
        %v486 = vadd.f32 %v484, %v485
        %v487 = vrot.slane %v486, 4
        %v488 = vadd.f32 %v486, %v487
        %v489 = vrot.slane %v488, 2
        %v490 = vadd.f32 %v488, %v489
        %v491 = vrot.slane %v490, 1
        %v492 = vadd.f32 %v490, %v491
        %v493 = vsel %vm427, %v415, 0.0
        %v494 = vsel %vm427, %v416, 0.0
        %v495 = vadd.f32 %v493, %v494
        %v496 = vsel %vm427, %v417, 0.0
        %v497 = vadd.f32 %v495, %v496
        %v498 = vsel %vm427, %v418, 0.0
        %v499 = vadd.f32 %v497, %v498
        %v500 = vrot.slane %v499, 4
        %v501 = vadd.f32 %v499, %v500
        %v502 = vrot.slane %v501, 2
        %v503 = vadd.f32 %v501, %v502
        %v504 = vrot.slane %v503, 1
        %v505 = vadd.f32 %v503, %v504
        %v506 = vsel %vm427, %v419, 0.0
        %v507 = vsel %vm427, %v420, 0.0
        %v508 = vadd.f32 %v506, %v507
        %v509 = vsel %vm427, %v421, 0.0
        %v510 = vadd.f32 %v508, %v509
        %v511 = vsel %vm427, %v422, 0.0
        %v512 = vadd.f32 %v510, %v511
        %v513 = vrot.slane %v512, 4
        %v514 = vadd.f32 %v512, %v513
        %v515 = vrot.slane %v514, 2
        %v516 = vadd.f32 %v514, %v515
        %v517 = vrot.slane %v516, 1
        %v518 = vadd.f32 %v516, %v517
        %v519 = vsel %vm427, %v423, 0.0
        %v520 = vsel %vm427, %v424, 0.0
        %v521 = vadd.f32 %v519, %v520
        %v522 = vsel %vm427, %v425, 0.0
        %v523 = vadd.f32 %v521, %v522
        %v524 = vsel %vm427, %v426, 0.0
        %v525 = vadd.f32 %v523, %v524
        %v526 = vrot.slane %v525, 4
        %v527 = vadd.f32 %v525, %v526
        %v528 = vrot.slane %v527, 2
        %v529 = vadd.f32 %v527, %v528
        %v530 = vrot.slane %v529, 1
        %v531 = vadd.f32 %v529, %v530
        %v532 = vld [vmem:[#allocation2] sm:$0xff]
        %v533 = vpack.c.bf16 %v440, %v440
        %v534 = vpack.c.bf16 %v453, %v453
        %v535 = vpack.c.bf16 %v466, %v466
        %v536 = vpack.c.bf16 %v479, %v479
        %v537 = vpack.c.bf16 %v492, %v492
        %v538 = vpack.c.bf16 %v505, %v505
        %v539 = vpack.c.bf16 %v518, %v518
        %v540 = vpack.c.bf16 %v531, %v531
        %v541 = vld [vmem:[%s1] sm:$0xf]
        %v542 = vld [vmem:[%s1 + $0x4] sm:$0xf]
        %v543 = vld [vmem:[%s1 + $0x8] sm:$0xf]
        %v544 = vld [vmem:[%s1 + $0xc] sm:$0xf]
        %v545 = vld [vmem:[%s1 + $0x10] sm:$0xf]
        %v546 = vld [vmem:[%s1 + $0x14] sm:$0xf]
        %v555 = vunpack.c.l.b16 %v533
        %v556 = vunpack.c.l.b16 %v534
        %v557 = vunpack.c.l.b16 %v535
        %v558 = vunpack.c.l.b16 %v536
        %v559 = vunpack.c.l.b16 %v537
        %v560 = vunpack.c.l.b16 %v538
        %v561 = vunpack.c.l.b16 %v539
        %v562 = vunpack.c.l.b16 %v540
        %vm563 = vcmask 1041409
        %v564 = vsel %vm563, %v556, %v555
        %vm565 = vcmask 1042434
        %v566 = vsel %vm565, %v557, %v564
        %vm567 = vcmask 1043459
        %v568 = vsel %vm567, %v558, %v566
        %vm569 = vcmask 1044484
        %v570 = vsel %vm569, %v559, %v568
        %vm571 = vcmask 1045509
        %v572 = vsel %vm571, %v560, %v570
        %vm573 = vcmask 1046534
        %v574 = vsel %vm573, %v561, %v572
        %vm575 = vcmask 1047559
        %v576 = vsel %vm575, %v562, %v574
        %v577 = vpack.c.b16 %v576, %v576
        %v584 = vunpack.c.l.b16 %v541
        %v585 = vunpack.c.l.b16 %v542
        %v586 = vunpack.c.l.b16 %v543
        %v587 = vunpack.c.l.b16 %v544
        %v588 = vunpack.c.l.b16 %v545
        %v589 = vunpack.c.l.b16 %v546
        %v590 = vpack.c.b16 %v585, %v584
        %v591 = vpack.c.b16 %v587, %v586
        %v592 = vpack.c.b16 %v589, %v588
        %v597 = vsel %vm427, %v577, 0
        %599 = vmatpush.bf16.msra.mxu0 0
        %600 = vmatpush.bf16.msra.mxu0 0
        %601 = vmatpush.bf16.msra.mxu0 0
        %602 = vmatpush.bf16.msra.mxu0 0
        %603 = vmatpush.bf16.msra.mxu0 0
        %604 = vmatpush.bf16.msra.mxu0 %v592
        %605 = vmatpush.bf16.msra.mxu0 %v591
        %606 = vmatpush.bf16.msra.mxu0 %v590
        %607 = vmatmul.bf16.gmra.mxu0 %v597
        %v608 = vpop.f32.mrf.mxu0
        %v609 = vadd.f32 0.0, %v608
        %v610 = vpop.f32.mrf.mxu0
        %611 = vdwg.mxu0
        %v612 = vadd.f32 %v532, %v609
        %vm613 = vcmask 261120
        %614 = vst.msk [vmem:[#allocation2] sm:$0xff] %vm613, %v612
        %p615 = scmp.eq.s32.totalorder %s22, 1
        // Predicated region
        $region78: #{tpu_custom_call.1} parent=68 // pred_check
          %p616 = pneg %p615
        $region79: #{tpu_custom_call.1} parent=68 // pred_check_branch
          %618 = sbr.rel (%p616) target = $region81
        $region80: #{tpu_custom_call.1} parent=68 // pred_region
          %v619 = vld [vmem:[#allocation2] sm:$0xff]
          %v620 = vmul.f32 %v619, 0.015625
          %v621 = vpack.c.bf16 %v620, %v620
          %v622 = vld [vmem:[%s2] sm:$0xf]
          %v623 = vld [vmem:[%s2 + $0x4] sm:$0xf]
          %v624 = vld [vmem:[%s2 + $0x8] sm:$0xf]
          %v625 = vld [vmem:[%s2 + $0xc] sm:$0xf]
          %v630 = vunpack.c.l.b16 %v622
          %v631 = vunpack.c.l.b16 %v623
          %v632 = vunpack.c.l.b16 %v624
          %v633 = vunpack.c.l.b16 %v625
          %v634 = vpack.c.b16 %v631, %v630
          %v635 = vpack.c.b16 %v633, %v632
          %v639 = vsel %vm613, %v621, 0
          %641 = vmatpush.bf16.msra.mxu0 0
          %642 = vmatpush.bf16.msra.mxu0 0
          %643 = vmatpush.bf16.msra.mxu0 0
          %644 = vmatpush.bf16.msra.mxu0 0
          %645 = vmatpush.bf16.msra.mxu0 0
          %646 = vmatpush.bf16.msra.mxu0 0
          %647 = vmatpush.bf16.msra.mxu0 %v635
          %648 = vmatpush.bf16.msra.mxu0 %v634
          %649 = vmatmul.bf16.gmra.mxu0 %v639
          %v650 = vpop.f32.mrf.mxu0
          %v651 = vadd.f32 0.0, %v650
          %v652 = vpop.f32.mrf.mxu0
          %653 = vdwg.mxu0
          %654 = vst [vmem:[%s353] sm:$0xff] %v651
        $region81: #{tpu_custom_call.1} parent=68 // pred_fallthru
          _
        %s655 = sand.u32 %s107, 1
        %s656 = scalar_lea.sflag [#allocation5], %s655
        %s657 = sand.u32 %s107, 1
        %s658 = smul.addr %s657, 8
        %s659 = scalar_lea.vmem [#allocation4], %s658
        // Predicated region
        $region82: #{tpu_custom_call.1} parent=68 // pred_check
          %p660 = pneg %p117
        $region83: #{tpu_custom_call.1} parent=68 // pred_check_branch
          %662 = sbr.rel (%p660) target = $region85
        $region84: #{tpu_custom_call.1} parent=68 // pred_region
          %664 = vsyncadd %s656, 0
          %s665 = smul.addr %s21, 8
          %s666 = scalar_lea.hbm %s3, %s665
          %s668 = sshll.u32 %s659, 4
          %s669 = int_to_ptr.vmem [resolvable:$true] %s668
          %s670 = sshll.u32 %s666, 4
          %s671 = int_to_ptr.hbm [resolvable:$true] %s670
          %673 = dma.vmem_to_hbm [thread:$0]  %s669, 128, %s671, %s656
        $region85: #{tpu_custom_call.1} parent=68 // pred_fallthru
          _
      $region69: #{tpu_custom_call.1} parent=5 // pred_fallthru
        _
      %p674 = scmp.le.s32.totalorder 2, %s12
      // Predicated region
      $region86: #{tpu_custom_call.1} parent=5 // pred_check
        %p675 = pneg %p674
      $region87: #{tpu_custom_call.1} parent=5 // pred_check_branch
        %677 = sbr.rel (%p675) target = $region89
      $region88: #{tpu_custom_call.1} parent=5 // pred_region
        %s678 = ssub.s32 %s12, 2
        // Predicated region
        $region90: #{tpu_custom_call.1} parent=88 // pred_check
          %p679 = pneg %p123
        $region91: #{tpu_custom_call.1} parent=88 // pred_check_branch
          %681 = sbr.rel (%p679) target = $region93
        $region92: #{tpu_custom_call.1} parent=88 // pred_region
          %s682 = sand.u32 %s108, 1
          %s683 = scalar_lea.sflag [#allocation5], %s682
          %s684 = sand.u32 %s108, 1
          %s685 = smul.addr %s684, 8
          %s686 = scalar_lea.vmem [#allocation4], %s685
          %688 = dma.done %s683, 128
        $region93: #{tpu_custom_call.1} parent=88 // pred_fallthru
          _
      $region89: #{tpu_custom_call.1} parent=5 // pred_fallthru
        _
    $region6: #{tpu_custom_call.1} parent=1 // loop_footer
      %s16 = sadd.s32 1, %s12
    $region7: #{tpu_custom_call.1} parent=1 // loop_footer_branch
      %11 = sbr.rel target = $region3
    $region8: #{tpu_custom_call.1} parent=1 // loop_exit
      _
    %689 = vsyncpa [#allocation5], 1
    %s690 = scalar_lea.sflag [#allocation5], 1
    %691 = vsyncpa %s690, 1

</llo_original>
